<compile_context>
chip_gen: v7x
topology: tpu7x:2x2x1
jax: 0.10.0
libtpu: 0.0.40
codegen_flags: <defaults>
</compile_context>

<pallas_src>
import functools
import math

import jax
import jax.numpy as jnp
from jax.experimental import pallas as pl
from jax.experimental.pallas import tpu as pltpu


# ----------------------------- kernels ------------------------------------


def _mean_kernel_single(x_ref, o_ref, *, inv_t):
    # Whole reduction fits in one block: no accumulator, no predication.
    s = jnp.sum(x_ref[...].astype(jnp.float32), axis=1)
    o_ref[...] = (s * inv_t).astype(o_ref.dtype)


def _mean_kernel_multi(x_ref, o_ref, acc_ref, *, inv_t):
    # x_ref: (tm, tt, tn) input tile; o_ref/acc_ref: (tm, tn).
    t = pl.program_id(2)

    @pl.when(t == 0)
    def _():
        acc_ref[...] = jnp.zeros_like(acc_ref)

    acc_ref[...] += jnp.sum(x_ref[...].astype(jnp.float32), axis=1)

    @pl.when(t == pl.num_programs(2) - 1)
    def _():
        o_ref[...] = (acc_ref[...] * inv_t).astype(o_ref.dtype)


# --------------------------- tile planning ---------------------------------


def _sublane_align(dtype):
    itemsize = jnp.dtype(dtype).itemsize
    if itemsize >= 4:
        return 8
    if itemsize == 2:
        return 16
    return 32


def _vmem_capacity_bytes():
    try:
        info = pltpu.get_tpu_info()
        cap = getattr(info, "vmem_capacity_bytes", None)
        if cap:
            return int(cap)
    except Exception:
        pass
    return 64 * 1024 * 1024  # conservative (v7x per-TensorCore VMEM)


def _default_vmem_budget():
    # Total live footprint target (2x input block + 2x output block + f32 acc).
    # 2-8 MiB input tiles already hit ~85% of the HBM roofline for mem-bound
    # kernels; staying under cap/4 keeps double-buffering alive on v7x (64 MiB
    # VMEM per TC) as well as v5e/v6e.
    return min(_vmem_capacity_bytes() // 4, 16 * 1024 * 1024)


def _largest_aligned_divisor(dim, align, cap):
    """Largest divisor of `dim` that is a multiple of `align` and <= cap."""
    cap = min(cap, dim)
    best = None
    d = align
    while d <= cap:
        if dim % d == 0:
            best = d
        d += align
    return best


def _plan_tiles(M, T, N, itemsize, align, budget):
    """Pick (tm, tt, tn, T_pad) obeying TPU layout rules under a byte budget:
    2*(tm*tt*tn*itemsize) + 2*(tm*tn*itemsize) + tm*tn*4 <= budget."""
    in_b = out_b = itemsize

    min_tm = align if (M >= align and M % align == 0) else M
    min_tt = align if (T >= align and T % align == 0) else T

    # ---- lane axis (N): full extent unless that alone blows the budget ----
    per_lane = 2 * min_tm * min_tt * in_b + 2 * min_tm * out_b + min_tm * 4
    tn_cap = max(budget // per_lane, 128)
    if N <= tn_cap:
        tn = N
    else:
        # Tile N in multiples of 128 (extra "parallel" blocks for megacore).
        tn = _largest_aligned_divisor(N, 128, tn_cap) or N

    # ---- reduce axis (T): second-to-last dim of the input block ----
    fixed = 2 * min_tm * tn * out_b + min_tm * tn * 4
    per_tt = 2 * min_tm * tn * in_b
    tt_cap = max((budget - fixed) // per_tt, align)
    T_pad = T
    if T <= tt_cap:
        tt = T
    else:
        tt = _largest_aligned_divisor(T, align, tt_cap)
        if tt is None:
            # No aligned divisor fits (e.g. prime T): zero-pad the reduce axis
            # (sum-neutral; we still scale by 1/T).
            tt = max(align, (tt_cap // align) * align)
            T_pad = ((T + tt - 1) // tt) * tt

    # ---- row axis (M): sublane dim of the 2-D output/accumulator block ----
    per_tm = 2 * tt * tn * in_b + 2 * tn * out_b + tn * 4
    tm_cap = max(budget // per_tm, min(M, align))
    if M <= tm_cap:
        tm = M
    else:
        tm = _largest_aligned_divisor(M, align, tm_cap) or M

    # ---- megacore: try to expose >= 2 parallel blocks (v7x: 2 TCs/chip) ----
    if (M // tm) * (N // tn) < 2:
        tm2 = _largest_aligned_divisor(M, align, M // 2)
        if tm2 is not None:
            tm = tm2
        else:
            tn2 = _largest_aligned_divisor(N, 128, N // 2)
            if tn2 is not None:
                tn = tn2

    return tm, tt, tn, T_pad


# ------------------------------ wrapper -------------------------------------


def global_avg_pool(x, *, vmem_budget_bytes=None):
    """Pallas TPU equivalent of torch.mean(x, dim=2) for rank >= 3 inputs."""
    assert x.ndim >= 3, "GlobalAvgPool reduces dim 2; need rank >= 3"
    lead = x.shape[:2]          # dims before the reduced axis
    T = x.shape[2]              # reduced axis
    trail = x.shape[3:]         # dims after the reduced axis
    M = math.prod(lead)
    N = math.prod(trail)

    # Lane-sparse shapes (< 128 lanes) waste >=75% of every vreg, force masked
    # stores, and are dominated by grid/launch overhead: XLA's fused mean wins.
    if N < 128 or T == 1:
        return jnp.mean(x, axis=2)

    in_b = jnp.dtype(x.dtype).itemsize
    align = _sublane_align(x.dtype)
    budget = (vmem_budget_bytes if vmem_budget_bytes is not None
              else _default_vmem_budget())

    tm, tt, tn, T_pad = _plan_tiles(M, T, N, in_b, align, budget)

    # Flatten to (M, T, N): N -> lane axis, T -> sublane/reduce axis.
    x3 = x.reshape(M, T, N)
    if T_pad != T:
        x3 = jnp.concatenate(
            [x3, jnp.zeros((M, T_pad - T, N), x3.dtype)], axis=1)

    gm, gn, gt = M // tm, N // tn, T_pad // tt
    single_step = gt == 1
    inv_t = 1.0 / T

    footprint = (2 * tm * tt * tn * in_b + 2 * tm * tn * in_b
                 + (0 if single_step else tm * tn * 4))
    cap = _vmem_capacity_bytes()
    vmem_limit = int(min(0.9 * cap, max(2 * footprint, 8 * 1024 * 1024)))

    cost = pl.CostEstimate(
        flops=M * T * N,
        transcendentals=0,
        bytes_accessed=M * T_pad * N * in_b + M * N * in_b,
    )

    if single_step:
        grid = (gm, gn)
        in_specs = [pl.BlockSpec((tm, tt, tn), lambda m, n: (m, 0, n))]
        out_specs = pl.BlockSpec((tm, tn), lambda m, n: (m, n))
        scratch = []
        semantics = ("parallel", "parallel")
        kernel = functools.partial(_mean_kernel_single, inv_t=inv_t)
    else:
        grid = (gm, gn, gt)   # reduction axis last, output block resident
        in_specs = [pl.BlockSpec((tm, tt, tn), lambda m, n, t: (m, t, n))]
        out_specs = pl.BlockSpec((tm, tn), lambda m, n, t: (m, n))
        scratch = [pltpu.VMEM((tm, tn), jnp.float32)]
        semantics = ("parallel", "parallel", "arbitrary")
        kernel = functools.partial(_mean_kernel_multi, inv_t=inv_t)

    out = pl.pallas_call(
        kernel,
        out_shape=jax.ShapeDtypeStruct((M, N), x.dtype),
        grid_spec=pltpu.PrefetchScalarGridSpec(
            num_scalar_prefetch=0,
            grid=grid,
            in_specs=in_specs,
            out_specs=out_specs,
            scratch_shapes=scratch,
        ),
        compiler_params=pltpu.CompilerParams(
            dimension_semantics=semantics,
            vmem_limit_bytes=vmem_limit,
        ),
        cost_estimate=cost,
    )(x3)

    return out.reshape(lead + trail)


if __name__ == "__main__":
    key = jax.random.PRNGKey(0)
    k1, k2, k3, k4 = jax.random.split(key, 4)

    # 1) Primary, lane-dense small case: single reduction step, no scratch.
    x = jax.random.normal(k1, (2, 4, 16, 128), dtype=jnp.float32)
    y = global_avg_pool(x)
    jax.block_until_ready(y)
    assert y.shape == (2, 4, 128)
    assert jnp.allclose(y, jnp.mean(x, axis=2), atol=1e-5, rtol=1e-5)

    # 2) Multi-step reduction grid (forced via a tiny VMEM budget) + lane tiling.
    x2 = jax.random.normal(k2, (2, 4, 256, 256), dtype=jnp.float32)
    y2 = global_avg_pool(x2, vmem_budget_bytes=256 * 1024)
    jax.block_until_ready(y2)
    assert y2.shape == (2, 4, 256)
    assert jnp.allclose(y2, jnp.mean(x2, axis=2), atol=1e-5, rtol=1e-5)

    # 3) bf16: dtype-aware sublane alignment (16), single-step path.
    x3 = jax.random.normal(k3, (2, 8, 32, 128), dtype=jnp.float32).astype(jnp.bfloat16)
    y3 = global_avg_pool(x3)
    jax.block_until_ready(y3)
    ref3 = jnp.mean(x3.astype(jnp.float32), axis=2)
    assert jnp.allclose(y3.astype(jnp.float32), ref3, atol=2e-2, rtol=2e-2)

    # 4) Lane-sparse shape takes the documented XLA-fallback path.
    x4 = jax.random.normal(k4, (2, 4, 8, 32), dtype=jnp.float32)
    y4 = global_avg_pool(x4)
    jax.block_until_ready(y4)
    assert jnp.allclose(y4, jnp.mean(x4, axis=2), atol=1e-5, rtol=1e-5)

    print("KERNEL_OK")
</pallas_src>

<mosaic_0001>
module attributes {stable_mosaic.version = 11 : i64} {
  func.func @_mean_kernel_single(%arg0: i32, %arg1: i32, %arg2: memref<8x16x128xf32, #tpu.memory_space<vmem>>, %arg3: memref<8x128xf32, #tpu.memory_space<vmem>>) attributes {dimension_semantics = [#tpu.dimension_semantics<parallel>, #tpu.dimension_semantics<parallel>], iteration_bounds = array<i64: 1, 1>, scalar_prefetch = 0 : i64, scratch_operands = 0 : i64, tpu.core_type = #tpu.core_type<tc>, window_params = [{transform_indices = @transform_0, window_bounds = array<i64: 8, 16, 128>}, {transform_indices = @transform_1, window_bounds = array<i64: 8, 128>}]} {
    %c0 = arith.constant 0 : index
    %c0_0 = arith.constant 0 : index
    %c0_1 = arith.constant 0 : index
    %0 = vector.load %arg2[%c0, %c0_0, %c0_1] : memref<8x16x128xf32, #tpu.memory_space<vmem>>, vector<8x16x128xf32>
    %cst = arith.constant dense<0.000000e+00> : vector<8x128xf32>
    %1 = vector.multi_reduction <add>, %0, %cst [1] : vector<8x16x128xf32> to vector<8x128xf32>
    %cst_2 = arith.constant 6.250000e-02 : f32
    %2 = vector.broadcast %cst_2 : f32 to vector<8x128xf32>
    %3 = arith.mulf %1, %2 : vector<8x128xf32>
    %c0_3 = arith.constant 0 : index
    %c0_4 = arith.constant 0 : index
    %4 = vector.load %arg3[%c0_3, %c0_4] : memref<8x128xf32, #tpu.memory_space<vmem>>, vector<8x128xf32>
    tpu.vector_store %arg3[%c0_3, %c0_4], %3 {strides = array<i32>} : memref<8x128xf32, #tpu.memory_space<vmem>>, vector<8x128xf32>,
    return
  }
  func.func @transform_0(%arg0: i32, %arg1: i32) -> (i32, i32, i32) {
    %c0_i32 = arith.constant 0 : i32
    %c0_i32_0 = arith.constant 0 : i32
    return %arg0, %c0_i32, %arg1 : i32, i32, i32
  }
  func.func @transform_1(%arg0: i32, %arg1: i32) -> (i32, i32) {
    %c0_i32 = arith.constant 0 : i32
    return %arg0, %arg1 : i32, i32
  }
}

</mosaic_0001>

<llo_original>
// kernel: tpu_custom_call.1
$region0: #{tpu_custom_call.1}
  #allocation0 [shape = 'u32[]', space=smem, size = 0x4, offset = 0x4, fixed_abs, tag = 'smem constant byte address 0x4 - core index']
  #allocation1 [shape = 'u32[144,128]{1,0:T(1,128)}', space=vmem, size = 0x12000, scoped, tag = 'internal scratch']
  %s0 = inlined_call_operand.hbm [shape: f32[8,16,128], index: 0, kind: input, shape index: {}]
  %s1 = inlined_call_operand.hbm [shape: f32[8,128], index: 1, kind: output, shape index: {}]
  %s2 = sld [smem:[#allocation0]]
  $region18: #{tpu_custom_call.1} parent=0
    _
  %s4 = ssub.s32 1, %s2
  %s5 = scalar_select 0, %s4, %s2
  $region1: #{tpu_custom_call.1} parent=0
    #allocation2 [shape = 'u8[65536]{0}', space=vmem, size = 0x10000, scoped, tag = 'input window, operand 0, single buffered']
    #allocation3 [shape = 's32[1]{0}', space=sflag, size = 0x4, scoped, tag = 'scoped memory for tpu_custom_call.1']
    #allocation4 [shape = 's32[1]{0}', space=sflag, size = 0x4, scoped, tag = 'scoped memory for tpu_custom_call.1']
    #allocation5 [shape = 'u8[4096]{0}', space=vmem, size = 0x1000, scoped, tag = 'output window, operand 0, single buffered']
    %6 = vsyncpa [#allocation3], 0
    %7 = vsyncpa [#allocation4], 0
    // Predicated region
    $region2: #{tpu_custom_call.1} parent=1 // pred_check
      _
    $region3: #{tpu_custom_call.1} parent=1 // pred_check_branch
      %9 = sbr.rel (0) target = $region5
    $region4: #{tpu_custom_call.1} parent=1 // pred_region
      %s11 = ssub.s32 2048, 2048
      %12 = vsyncadd [#allocation3], %s11
      %s13 = sshll.u32 [#allocation2], 4
      %s14 = int_to_ptr.vmem [resolvable:$true] %s13
      %19 = dma.hbm_to_vmem [thread:$0]  %s0, 2048, %s14, [#allocation3], 128, 128, 8
    $region5: #{tpu_custom_call.1} parent=1 // pred_fallthru
      _
    // Predicated region
    $region6: #{tpu_custom_call.1} parent=1 // pred_check
      _
    $region7: #{tpu_custom_call.1} parent=1 // pred_check_branch
      %21 = sbr.rel (0) target = $region9
    $region8: #{tpu_custom_call.1} parent=1 // pred_region
      %22 = dma.done [#allocation3], 2048
    $region9: #{tpu_custom_call.1} parent=1 // pred_fallthru
      _
    %v23 = vld [vmem:[#allocation2] sm:$0xff]
    %v24 = vld [vmem:[#allocation2 + $0x8] sm:$0xff]
    %v25 = vld [vmem:[#allocation2 + $0x10] sm:$0xff]
    %v26 = vld [vmem:[#allocation2 + $0x18] sm:$0xff]
    %v27 = vld [vmem:[#allocation2 + $0x20] sm:$0xff]
    %v28 = vld [vmem:[#allocation2 + $0x28] sm:$0xff]
    %v29 = vld [vmem:[#allocation2 + $0x30] sm:$0xff]
    %v30 = vld [vmem:[#allocation2 + $0x38] sm:$0xff]
    %v31 = vld [vmem:[#allocation2 + $0x40] sm:$0xff]
    %v32 = vld [vmem:[#allocation2 + $0x48] sm:$0xff]
    %v33 = vld [vmem:[#allocation2 + $0x50] sm:$0xff]
    %v34 = vld [vmem:[#allocation2 + $0x58] sm:$0xff]
    %v35 = vld [vmem:[#allocation2 + $0x60] sm:$0xff]
    %v36 = vld [vmem:[#allocation2 + $0x68] sm:$0xff]
    %v37 = vld [vmem:[#allocation2 + $0x70] sm:$0xff]
    %v38 = vld [vmem:[#allocation2 + $0x78] sm:$0xff]
    %v39 = vadd.f32 %v23, %v24
    %v40 = vrot.slane %v39, 4
    %v41 = vadd.f32 %v39, %v40
    %v42 = vrot.slane %v41, 2
    %v43 = vadd.f32 %v41, %v42
    %v44 = vrot.slane %v43, 1
    %v45 = vadd.f32 %v43, %v44
    %v46 = vadd.f32 %v25, %v26
    %v47 = vrot.slane %v46, 4
    %v48 = vadd.f32 %v46, %v47
    %v49 = vrot.slane %v48, 2
    %v50 = vadd.f32 %v48, %v49
    %v51 = vrot.slane %v50, 1
    %v52 = vadd.f32 %v50, %v51
    %v53 = vadd.f32 %v27, %v28
    %v54 = vrot.slane %v53, 4
    %v55 = vadd.f32 %v53, %v54
    %v56 = vrot.slane %v55, 2
    %v57 = vadd.f32 %v55, %v56
    %v58 = vrot.slane %v57, 1
    %v59 = vadd.f32 %v57, %v58
    %v60 = vadd.f32 %v29, %v30
    %v61 = vrot.slane %v60, 4
    %v62 = vadd.f32 %v60, %v61
    %v63 = vrot.slane %v62, 2
    %v64 = vadd.f32 %v62, %v63
    %v65 = vrot.slane %v64, 1
    %v66 = vadd.f32 %v64, %v65
    %v67 = vadd.f32 %v31, %v32
    %v68 = vrot.slane %v67, 4
    %v69 = vadd.f32 %v67, %v68
    %v70 = vrot.slane %v69, 2
    %v71 = vadd.f32 %v69, %v70
    %v72 = vrot.slane %v71, 1
    %v73 = vadd.f32 %v71, %v72
    %v74 = vadd.f32 %v33, %v34
    %v75 = vrot.slane %v74, 4
    %v76 = vadd.f32 %v74, %v75
    %v77 = vrot.slane %v76, 2
    %v78 = vadd.f32 %v76, %v77
    %v79 = vrot.slane %v78, 1
    %v80 = vadd.f32 %v78, %v79
    %v81 = vadd.f32 %v35, %v36
    %v82 = vrot.slane %v81, 4
    %v83 = vadd.f32 %v81, %v82
    %v84 = vrot.slane %v83, 2
    %v85 = vadd.f32 %v83, %v84
    %v86 = vrot.slane %v85, 1
    %v87 = vadd.f32 %v85, %v86
    %v88 = vadd.f32 %v37, %v38
    %v89 = vrot.slane %v88, 4
    %v90 = vadd.f32 %v88, %v89
    %v91 = vrot.slane %v90, 2
    %v92 = vadd.f32 %v90, %v91
    %v93 = vrot.slane %v92, 1
    %v94 = vadd.f32 %v92, %v93
    %v95 = vmul.f32 %v45, 0.0625
    %v96 = vmul.f32 %v52, 0.0625
    %v97 = vmul.f32 %v59, 0.0625
    %v98 = vmul.f32 %v66, 0.0625
    %v99 = vmul.f32 %v73, 0.0625
    %v100 = vmul.f32 %v80, 0.0625
    %v101 = vmul.f32 %v87, 0.0625
    %v102 = vmul.f32 %v94, 0.0625
    %vm111 = vcmask 1041409
    %v112 = vsel %vm111, %v96, %v95
    %vm113 = vcmask 1042434
    %v114 = vsel %vm113, %v97, %v112
    %vm115 = vcmask 1043459
    %v116 = vsel %vm115, %v98, %v114
    %vm117 = vcmask 1044484
    %v118 = vsel %vm117, %v99, %v116
    %vm119 = vcmask 1045509
    %v120 = vsel %vm119, %v100, %v118
    %vm121 = vcmask 1046534
    %v122 = vsel %vm121, %v101, %v120
    %vm123 = vcmask 1047559
    %v124 = vsel %vm123, %v102, %v122
    %126 = vst [vmem:[#allocation5] sm:$0xff] %v124
    // Predicated region
    $region10: #{tpu_custom_call.1} parent=1 // pred_check
      _
    $region11: #{tpu_custom_call.1} parent=1 // pred_check_branch
      %128 = sbr.rel (0) target = $region13
    $region12: #{tpu_custom_call.1} parent=1 // pred_region
      %s130 = ssub.s32 128, 128
      %131 = vsyncadd [#allocation4], %s130
      %s133 = sshll.u32 [#allocation5], 4
      %s134 = int_to_ptr.vmem [resolvable:$true] %s133
      %136 = dma.vmem_to_hbm [thread:$0]  %s134, 128, %s1, [#allocation4]
    $region13: #{tpu_custom_call.1} parent=1 // pred_fallthru
      _
    // Predicated region
    $region14: #{tpu_custom_call.1} parent=1 // pred_check
      _
    $region15: #{tpu_custom_call.1} parent=1 // pred_check_branch
      %138 = sbr.rel (0) target = $region17
    $region16: #{tpu_custom_call.1} parent=1 // pred_region
      %139 = dma.done [#allocation4], 128
    $region17: #{tpu_custom_call.1} parent=1 // pred_fallthru
      _
    %140 = vsyncpa [#allocation3], 1
    %141 = vsyncpa [#allocation4], 1

</llo_original>
